<compile_context>
chip_gen: v5e
topology: v5e:2x2
jax: 0.10.0
libtpu: 0.0.40
codegen_flags: <defaults>
</compile_context>

<pallas_src>
import jax
import jax.numpy as jnp
from jax import lax
from jax.experimental import pallas as pl
from jax.experimental.pallas import tpu as pltpu


# --------------------------------------------------------------------------- #
# Kernel bodies
# --------------------------------------------------------------------------- #
def _make_vpu_kernel(f_out: int, f_skip: int):
    """ln path as VPU broadcast-multiply + lane reduce (tiny F_out, no MXU)."""

    def kernel(x_ref, xin_ref, w_ln_ref, w_skp_ref, b_ref, o_ref):
        # x_ref    : [tb, K]           activations (unpadded K)
        # w_ln_ref : [F_out, K]        folded weight g*v/||v|| (row-major)
        # xin_ref  : [tb, F_skip]
        # w_skp_ref: [F_skip, F_out]   folded skip weight
        # b_ref    : [1, F_out]
        x = x_ref[...]
        xin = xin_ref[...]

        cols = []
        for j in range(f_out):                              # static unroll, tiny
            cols.append(jnp.sum(x * w_ln_ref[j:j + 1, :], axis=-1, keepdims=True))
        y = cols[0] if f_out == 1 else jnp.concatenate(cols, axis=-1)

        for k in range(f_skip):                             # static unroll, tiny
            y = y + xin[:, k:k + 1] * w_skp_ref[k:k + 1, :]

        o_ref[...] = (y + b_ref[...]).astype(o_ref.dtype)

    return kernel


def _make_mxu_kernel(f_skip: int, unroll_skip: bool):
    """ln path on the MXU (F_out large enough to fill result lanes)."""

    def kernel(x_ref, xin_ref, w_ln_t_ref, w_skp_t_ref, b_ref, o_ref):
        # w_ln_t_ref : [K, F_out]  folded weight, transposed for (B,K)@(K,N)
        y = jnp.dot(x_ref[...], w_ln_t_ref[...],
                    preferred_element_type=jnp.float32)     # f32 accumulation
        xin = xin_ref[...]
        if unroll_skip:
            for k in range(f_skip):                          # tiny K: stay on VPU
                y = y + xin[:, k:k + 1] * w_skp_t_ref[k:k + 1, :]
        else:
            y = y + jnp.dot(xin, w_skp_t_ref[...],
                            preferred_element_type=jnp.float32)
        o_ref[...] = (y + b_ref[...]).astype(o_ref.dtype)

    return kernel


# --------------------------------------------------------------------------- #
# One-time parameter preparation (do this ONCE, outside the forward path)
# --------------------------------------------------------------------------- #
def prepare_wn_out_params(v_ln, g_ln, b_ln, v_skp, g_skp,
                          *, compute_dtype=jnp.float32):
    """Fold weight-norm (W = g*v/||v||) and lay weights out for the kernel.

    v_ln : [F_out, F_in]   g_ln : [F_out, 1]   b_ln : [F_out]
    v_skp: [F_out, F_skip] g_skp: [F_out, 1]
    """
    f_out, f_in = v_ln.shape
    f_skip = v_skp.shape[1]
    use_mxu = f_out > 8                      # tiny F_out: MXU is ~0% utilized

    scale_ln = g_ln.reshape(f_out, 1) * lax.rsqrt(
        jnp.sum(v_ln * v_ln, axis=1, keepdims=True))
    scale_skp = g_skp.reshape(f_out, 1) * lax.rsqrt(
        jnp.sum(v_skp * v_skp, axis=1, keepdims=True))
    w_ln = v_ln * scale_ln                    # [F_out, F_in]
    w_skp = v_skp * scale_skp                 # [F_out, F_skip]

    if use_mxu:
        # bf16 (if requested) only touches MXU operands; VPU/EUP math stays f32
        # (v5e has no bf16 VPU/EUP).
        w_ln_kernel = w_ln.T.astype(compute_dtype)           # [K, F_out]
    else:
        w_ln_kernel = w_ln.astype(jnp.float32)               # [F_out, K]
    w_skp_kernel = w_skp.T.astype(jnp.float32)                # [F_skip, F_out]
    b_kernel = b_ln.reshape(1, f_out).astype(jnp.float32)     # [1, F_out]

    return dict(w_ln=w_ln_kernel, w_skp=w_skp_kernel, b=b_kernel,
                f_in=f_in, f_out=f_out, f_skip=f_skip,
                use_mxu=use_mxu, compute_dtype=compute_dtype)


# --------------------------------------------------------------------------- #
# Forward wrapper
# --------------------------------------------------------------------------- #
def wn_out_block(x, x_input, params, *, batch_tile: int = 512,
                 min_split: int = 256):
    """WNOutBlock forward.  `params` comes from prepare_wn_out_params (cached).

    x      : [B, F_in]     (unpadded; K stays exactly F_in in HBM and VMEM)
    x_input: [B, F_skip]
    """
    B = x.shape[0]
    f_in, f_out, f_skip = params["f_in"], params["f_out"], params["f_skip"]
    use_mxu = params["use_mxu"]
    compute_dtype = params["compute_dtype"]

    if use_mxu and x.dtype != compute_dtype:
        # Callers should ideally store activations in compute_dtype already so
        # the halved HBM traffic is realized; this is a fallback, not in-kernel.
        x = x.astype(compute_dtype)

    # Batch tiling: large tiles (>=512 rows hits the HBM roofline sweet spot),
    # but keep >=2 grid steps for mid-sized batches so v7x's two TensorCores
    # both get work via dimension_semantics=("parallel",).
    if B > batch_tile:
        tb = batch_tile
    elif B >= min_split and B % 16 == 0:
        tb = B // 2
    else:
        tb = B
    grid = (pl.cdiv(B, tb),)

    batched = lambda i: (i, 0)     # activation / output tiles follow the grid
    resident = lambda i: (0, 0)    # weights stay VMEM-resident across steps

    kernel = (_make_mxu_kernel(f_skip, unroll_skip=(f_skip <= 8)) if use_mxu
              else _make_vpu_kernel(f_out, f_skip))

    return pl.pallas_call(
        kernel,
        out_shape=jax.ShapeDtypeStruct((B, f_out), jnp.float32),
        grid=grid,
        in_specs=[
            pl.BlockSpec((tb, f_in), batched),              # x (last dim = full)
            pl.BlockSpec((tb, f_skip), batched),            # x_input
            pl.BlockSpec(params["w_ln"].shape, resident),   # folded ln weight
            pl.BlockSpec(params["w_skp"].shape, resident),  # folded skip weight
            pl.BlockSpec((1, f_out), resident),             # bias
        ],
        out_specs=pl.BlockSpec((tb, f_out), batched),
        compiler_params=pltpu.CompilerParams(
            dimension_semantics=("parallel",)),
    )(x, x_input, params["w_ln"], params["w_skp"], params["b"])


# --------------------------------------------------------------------------- #
# Pure-JAX reference (matches the PyTorch module)
# --------------------------------------------------------------------------- #
def wn_out_block_ref(x, x_input, v_ln, g_ln, b_ln, v_skp, g_skp):
    w_ln = g_ln * v_ln / jnp.linalg.norm(v_ln, axis=1, keepdims=True)
    w_skp = g_skp * v_skp / jnp.linalg.norm(v_skp, axis=1, keepdims=True)
    return x @ w_ln.T + b_ln[None, :] + x_input @ w_skp.T


if __name__ == "__main__":
    # Module defaults: in_features=130, out_features=1, in_skip_features=2.
    B, F_IN, F_OUT, F_SKIP = 8, 130, 1, 2

    key = jax.random.PRNGKey(0)
    k_x, k_xi, k_vln, k_gln, k_bln, k_vskp, k_gskp = jax.random.split(key, 7)

    x = jax.random.normal(k_x, (B, F_IN), dtype=jnp.float32)
    x_input = jax.random.normal(k_xi, (B, F_SKIP), dtype=jnp.float32)

    # Deterministic synthetic parameters (shapes from WNLinear / weight_norm).
    v_ln = jax.random.normal(k_vln, (F_OUT, F_IN), dtype=jnp.float32) * 0.1
    g_ln = jax.random.uniform(k_gln, (F_OUT, 1), dtype=jnp.float32) + 0.5
    b_ln = jax.random.normal(k_bln, (F_OUT,), dtype=jnp.float32) * 0.1
    v_skp = jax.random.normal(k_vskp, (F_OUT, F_SKIP), dtype=jnp.float32) * 0.1
    g_skp = jax.random.uniform(k_gskp, (F_OUT, 1), dtype=jnp.float32) + 0.5

    # One-time parameter prep (weight-norm fold + layout), cached by the caller.
    params = prepare_wn_out_params(v_ln, g_ln, b_ln, v_skp, g_skp)
    params = jax.tree_util.tree_map(
        lambda a: jax.block_until_ready(a) if isinstance(a, jax.Array) else a,
        params)

    out = wn_out_block(x, x_input, params)
    out = jax.block_until_ready(out)

    ref = wn_out_block_ref(x, x_input, v_ln, g_ln, b_ln, v_skp, g_skp)
    assert out.shape == (B, F_OUT)
    assert jnp.allclose(out, ref, atol=1e-5, rtol=1e-5), "mismatch vs reference"

    print("KERNEL_OK")
</pallas_src>

<mosaic_0001>
module attributes {stable_mosaic.version = 11 : i64} {
  func.func @kernel(%arg0: i32, %arg1: memref<8x130xf32, #tpu.memory_space<vmem>>, %arg2: memref<8x2xf32, #tpu.memory_space<vmem>>, %arg3: memref<1x130xf32, #tpu.memory_space<vmem>>, %arg4: memref<2x1xf32, #tpu.memory_space<vmem>>, %arg5: memref<1x1xf32, #tpu.memory_space<vmem>>, %arg6: memref<8x1xf32, #tpu.memory_space<vmem>>) attributes {dimension_semantics = [#tpu.dimension_semantics<parallel>], iteration_bounds = array<i64: 1>, scalar_prefetch = 0 : i64, scratch_operands = 0 : i64, tpu.core_type = #tpu.core_type<tc>, window_params = [{transform_indices = @transform_0, window_bounds = array<i64: 8, 130>}, {transform_indices = @transform_1, window_bounds = array<i64: 8, 2>}, {pipeline_mode = #tpu.pipeline_mode<synchronous>, transform_indices = @transform_2, window_bounds = array<i64: 1, 130>}, {pipeline_mode = #tpu.pipeline_mode<synchronous>, transform_indices = @transform_3, window_bounds = array<i64: 2, 1>}, {pipeline_mode = #tpu.pipeline_mode<synchronous>, transform_indices = @transform_4, window_bounds = array<i64: 1, 1>}, {transform_indices = @transform_5, window_bounds = array<i64: 8, 1>}]} {
    %c0 = arith.constant 0 : index
    %c0_0 = arith.constant 0 : index
    %0 = vector.load %arg1[%c0, %c0_0] : memref<8x130xf32, #tpu.memory_space<vmem>>, vector<8x130xf32>
    %c0_1 = arith.constant 0 : index
    %c0_2 = arith.constant 0 : index
    %1 = vector.load %arg2[%c0_1, %c0_2] : memref<8x2xf32, #tpu.memory_space<vmem>>, vector<8x2xf32>
    %c0_3 = arith.constant 0 : index
    %c0_4 = arith.constant 0 : index
    %2 = vector.load %arg3[%c0_3, %c0_4] : memref<1x130xf32, #tpu.memory_space<vmem>>, vector<1x130xf32>
    %3 = vector.broadcast %2 : vector<1x130xf32> to vector<8x130xf32>
    %4 = arith.mulf %0, %3 : vector<8x130xf32>
    %cst = arith.constant dense<0.000000e+00> : vector<8xf32>
    %5 = vector.multi_reduction <add>, %4, %cst [1] : vector<8x130xf32> to vector<8xf32>
    %6 = vector.shape_cast %5 : vector<8xf32> to vector<8x1xf32>
    %7 = vector.extract_strided_slice %1 {offsets = [0, 0], sizes = [8, 1], strides = [1, 1]} : vector<8x2xf32> to vector<8x1xf32>
    %c0_5 = arith.constant 0 : index
    %c0_6 = arith.constant 0 : index
    %8 = vector.load %arg4[%c0_5, %c0_6] : memref<2x1xf32, #tpu.memory_space<vmem>>, vector<1x1xf32>
    %9 = vector.broadcast %8 : vector<1x1xf32> to vector<8x1xf32>
    %10 = arith.mulf %7, %9 : vector<8x1xf32>
    %11 = arith.addf %6, %10 : vector<8x1xf32>
    %12 = vector.extract_strided_slice %1 {offsets = [0, 1], sizes = [8, 1], strides = [1, 1]} : vector<8x2xf32> to vector<8x1xf32>
    %c1 = arith.constant 1 : index
    %c0_7 = arith.constant 0 : index
    %13 = vector.load %arg4[%c1, %c0_7] : memref<2x1xf32, #tpu.memory_space<vmem>>, vector<1x1xf32>
    %14 = vector.broadcast %13 : vector<1x1xf32> to vector<8x1xf32>
    %15 = arith.mulf %12, %14 : vector<8x1xf32>
    %16 = arith.addf %11, %15 : vector<8x1xf32>
    %c0_8 = arith.constant 0 : index
    %c0_9 = arith.constant 0 : index
    %17 = vector.load %arg5[%c0_8, %c0_9] : memref<1x1xf32, #tpu.memory_space<vmem>>, vector<1x1xf32>
    %18 = vector.broadcast %17 : vector<1x1xf32> to vector<8x1xf32>
    %19 = arith.addf %16, %18 : vector<8x1xf32>
    %c0_10 = arith.constant 0 : index
    %c0_11 = arith.constant 0 : index
    %20 = vector.load %arg6[%c0_10, %c0_11] : memref<8x1xf32, #tpu.memory_space<vmem>>, vector<8x1xf32>
    tpu.vector_store %arg6[%c0_10, %c0_11], %19 {strides = array<i32>} : memref<8x1xf32, #tpu.memory_space<vmem>>, vector<8x1xf32>,
    return
  }
  func.func @transform_0(%arg0: i32) -> (i32, i32) {
    %c0_i32 = arith.constant 0 : i32
    %c0_i32_0 = arith.constant 0 : i32
    return %arg0, %c0_i32 : i32, i32
  }
  func.func @transform_1(%arg0: i32) -> (i32, i32) {
    %c0_i32 = arith.constant 0 : i32
    %c0_i32_0 = arith.constant 0 : i32
    return %arg0, %c0_i32 : i32, i32
  }
  func.func @transform_2(%arg0: i32) -> (i32, i32) {
    %c0_i32 = arith.constant 0 : i32
    %c0_i32_0 = arith.constant 0 : i32
    %c0_i32_1 = arith.constant 0 : i32
    return %c0_i32, %c0_i32_0 : i32, i32
  }
  func.func @transform_3(%arg0: i32) -> (i32, i32) {
    %c0_i32 = arith.constant 0 : i32
    %c0_i32_0 = arith.constant 0 : i32
    %c0_i32_1 = arith.constant 0 : i32
    return %c0_i32, %c0_i32_0 : i32, i32
  }
  func.func @transform_4(%arg0: i32) -> (i32, i32) {
    %c0_i32 = arith.constant 0 : i32
    %c0_i32_0 = arith.constant 0 : i32
    %c0_i32_1 = arith.constant 0 : i32
    return %c0_i32, %c0_i32_0 : i32, i32
  }
  func.func @transform_5(%arg0: i32) -> (i32, i32) {
    %c0_i32 = arith.constant 0 : i32
    %c0_i32_0 = arith.constant 0 : i32
    return %arg0, %c0_i32 : i32, i32
  }
}

</mosaic_0001>

<llo_original>
// kernel: tpu_custom_call.1
$region0: #{tpu_custom_call.1}
  #allocation0 [shape = 'u32[]', space=smem, size = 0x4, offset = 0x4, fixed_abs, tag = 'smem constant byte address 0x4 - core index']
  #allocation1 [shape = 'u32[72,128]{1,0:T(1,128)}', space=vmem, size = 0x9000, scoped, tag = 'internal scratch']
  #allocation2 [shape = 'f32[1,1]{1,0:T(1,128)S(1)}', space=vmem, size = 0x200, scoped, tag = 'scoped memory for tpu_custom_call.1']
  %s0 = inlined_call_operand.hbm [shape: f32[8,130], index: 0, kind: input, shape index: {}]
  %s1 = inlined_call_operand.vmem [shape: f32[8,2], index: 1, kind: input, shape index: {}]
  %s2 = inlined_call_operand.vmem [shape: f32[1,130], index: 2, kind: input, shape index: {}]
  %s3 = inlined_call_operand.vmem [shape: f32[2,1], index: 3, kind: input, shape index: {}]
  %s4 = inlined_call_operand.<no memory space> [shape: f32[1,1], index: 4, kind: input, shape index: {}]
  %s5 = inlined_call_operand.vmem [shape: f32[8,1], index: 5, kind: output, shape index: {}]
  %s6 = sld [smem:[#allocation0]]
  $region34: #{tpu_custom_call.1} parent=0
    _
  %s8 = ssub.s32 1, %s6
  %s9 = scalar_select 0, %s8, %s6
  %v10 = vstv %s4
  %11 = vst [vmem:[#allocation2] sm:$0x1] %v10
  $region1: #{tpu_custom_call.1} parent=0
    #allocation3 [shape = 'u8[8192]{0}', space=vmem, size = 0x2000, scoped, tag = 'input window, operand 0, single buffered']
    #allocation4 [shape = 's32[1]{0}', space=sflag, size = 0x4, scoped, tag = 'scoped memory for tpu_custom_call.1']
    %12 = vsyncpa [#allocation4], 0
    // Predicated region
    $region2: #{tpu_custom_call.1} parent=1 // pred_check
      _
    $region3: #{tpu_custom_call.1} parent=1 // pred_check_branch
      %14 = sbr.rel (0) target = $region5
    $region4: #{tpu_custom_call.1} parent=1 // pred_region
      %16 = vsyncadd [#allocation4], 0
      %s18 = sshll.u32 %s0, 4
      %s19 = int_to_ptr.hbm [resolvable:$true] %s18
      %s20 = sshll.u32 [#allocation3], 4
      %s21 = int_to_ptr.vmem [resolvable:$true] %s20
      %23 = dma.hbm_to_vmem [thread:$0]  %s19, 256, %s21, [#allocation4]
    $region5: #{tpu_custom_call.1} parent=1 // pred_fallthru
      _
    // Predicated region
    $region6: #{tpu_custom_call.1} parent=1 // pred_check
      _
    $region7: #{tpu_custom_call.1} parent=1 // pred_check_branch
      %25 = sbr.rel (0) target = $region9
    $region8: #{tpu_custom_call.1} parent=1 // pred_region
      _
    $region9: #{tpu_custom_call.1} parent=1 // pred_fallthru
      _
    // Predicated region
    $region10: #{tpu_custom_call.1} parent=1 // pred_check
      _
    $region11: #{tpu_custom_call.1} parent=1 // pred_check_branch
      %27 = sbr.rel (0) target = $region13
    $region12: #{tpu_custom_call.1} parent=1 // pred_region
      _
    $region13: #{tpu_custom_call.1} parent=1 // pred_fallthru
      _
    // Predicated region
    $region14: #{tpu_custom_call.1} parent=1 // pred_check
      _
    $region15: #{tpu_custom_call.1} parent=1 // pred_check_branch
      %29 = sbr.rel (0) target = $region17
    $region16: #{tpu_custom_call.1} parent=1 // pred_region
      _
    $region17: #{tpu_custom_call.1} parent=1 // pred_fallthru
      _
    // Predicated region
    $region18: #{tpu_custom_call.1} parent=1 // pred_check
      _
    $region19: #{tpu_custom_call.1} parent=1 // pred_check_branch
      %31 = sbr.rel (0) target = $region21
    $region20: #{tpu_custom_call.1} parent=1 // pred_region
      _
    $region21: #{tpu_custom_call.1} parent=1 // pred_fallthru
      _
    // Predicated region
    $region22: #{tpu_custom_call.1} parent=1 // pred_check
      _
    $region23: #{tpu_custom_call.1} parent=1 // pred_check_branch
      %33 = sbr.rel (0) target = $region25
    $region24: #{tpu_custom_call.1} parent=1 // pred_region
      %35 = dma.done [#allocation4], 256
    $region25: #{tpu_custom_call.1} parent=1 // pred_fallthru
      _
    %v36 = vld [vmem:[#allocation3] sm:$0xff]
    %v37 = vld [vmem:[#allocation3 + $0x8] sm:$0xff]
    %v38 = vld [vmem:[%s1] sm:$0xff]
    %v39 = vld [vmem:[%s2] sm:$0x3]
    %v41 = vperm.slane %v39, 0
    %v42 = vperm.slane %v39, 1
    %v45 = vmul.f32 %v36, %v41
    %v46 = vmul.f32 %v37, %v42
    %vm47 = vcmask 15360
    %v48 = vsel %vm47, %v46, 0.0
    %v49 = vadd.f32 %v45, %v48
    %50 = vadd.xlane.f32.xlu0 %v49
    %v51 = vpop.xlane.xlu0 %50
    %v52 = vld [vmem:[%s3] sm:$0x1]
    %v53 = vperm.slane %v52, 0
    %v54 = vmul.f32 %v38, %v53
    %v55 = vadd.f32 %v51, %v54
    %v56 = vld [vmem:[%s3 + $0x1] sm:$0x1]
    %v57 = vperm.slane %v56, 0
    %59 = vrot.lane.b32.xlu0 %v57, 1
    %v60 = vpop.permute.xlu0 %59
    %v62 = vmul.f32 %v38, %v60
    %64 = vrot.lane.b32.xlu0 %v62, 127
    %v65 = vpop.permute.xlu0 %64
    %v67 = vadd.f32 %v55, %v65
    %v68 = vld [vmem:[#allocation2] sm:$0x1]
    %v70 = vperm.slane %v68, 0
    %v72 = vadd.f32 %v67, %v70
    %vm73 = vcmask 7168
    %74 = vst.msk [vmem:[%s5] sm:$0xff] %vm73, %v72
    // Predicated region
    $region26: #{tpu_custom_call.1} parent=1 // pred_check
      _
    $region27: #{tpu_custom_call.1} parent=1 // pred_check_branch
      %76 = sbr.rel (0) target = $region29
    $region28: #{tpu_custom_call.1} parent=1 // pred_region
      _
    $region29: #{tpu_custom_call.1} parent=1 // pred_fallthru
      _
    // Predicated region
    $region30: #{tpu_custom_call.1} parent=1 // pred_check
      _
    $region31: #{tpu_custom_call.1} parent=1 // pred_check_branch
      %78 = sbr.rel (0) target = $region33
    $region32: #{tpu_custom_call.1} parent=1 // pred_region
      _
    $region33: #{tpu_custom_call.1} parent=1 // pred_fallthru
      _
    %79 = vsyncpa [#allocation4], 1

</llo_original>
